<compile_context>
chip_gen: v6e
topology: v6e:2x2x1
jax: 0.10.0
libtpu: 0.0.40
codegen_flags: <defaults>
</compile_context>

<pallas_src>
import jax
import jax.numpy as jnp
from jax.experimental import pallas as pl
from jax.experimental.pallas import tpu as pltpu

_SMALL_ELEMS = 256 * 1024   # below this, XLA's fused elementwise wins (no launch/boundary cost)


def _affine_kernel(wb_ref, x_ref, o_ref):
    # wb_ref: (2,) f32 [weight, bias] scalars in SMEM.
    # x_ref/o_ref: (tile_rows, LANE) VMEM tiles in the input's native dtype.
    y = x_ref[...].astype(jnp.float32) * wb_ref[0] + wb_ref[1]
    o_ref[...] = y.astype(o_ref.dtype)


def _device_kind():
    try:
        return jax.devices()[0].device_kind.lower()
    except Exception:
        return ""


def _pick_lane(total):
    """Largest lane-dense width (multiple of 128) that exactly divides `total`."""
    for lane in (512, 256, 128):
        if total % lane == 0:
            return lane
    return None


def _affine_pallas(x2d, wb, *, tile_bytes=None, donate_input=False):
    """y = x*w + b over a (rows, lane) view; no padding, ragged last block masked."""
    m_raw, lane = x2d.shape
    itemsize = jnp.dtype(x2d.dtype).itemsize
    kind = _device_kind()

    if tile_bytes is None:
        # v6e/v7x: ~4 MiB tiles (2 arrays x 2 buffers = 16 MiB, fits 32 MiB scoped VMEM).
        # v5e / unknown: ~2 MiB tiles (8 MiB double-buffered, safe inside 16 MiB default).
        tile_bytes = (4 << 20) if ("v6" in kind or "v7" in kind) else (2 << 20)

    # Sublane alignment: 8 rows for 4-byte, 16 for 2-byte dtypes.
    sub = max(8, 32 // itemsize)
    rows_target = max(sub, (tile_bytes // (lane * itemsize)) // sub * sub)

    if m_raw <= rows_target:
        tm = m_raw                      # full-extent block: always a legal block shape
    else:
        tm = rows_target                # multiple of `sub`; ragged final block is masked
    n_steps = pl.cdiv(m_raw, tm)

    # v7x: shard the row axis across both TensorCores. Elsewhere this is a no-op lever.
    if "v7" in kind and n_steps >= 2:
        dims = (pltpu.CORE_PARALLEL,)
    else:
        dims = ("arbitrary",)

    cost = pl.CostEstimate(
        flops=2 * m_raw * lane,
        transcendentals=0,
        bytes_accessed=2 * m_raw * lane * itemsize + 8,
    )

    return pl.pallas_call(
        _affine_kernel,
        out_shape=jax.ShapeDtypeStruct((m_raw, lane), x2d.dtype),
        grid=(n_steps,),
        in_specs=[
            pl.BlockSpec(memory_space=pltpu.MemorySpace.SMEM),   # [w, b] scalars
            pl.BlockSpec((tm, lane), lambda i: (i, 0)),          # input tile
        ],
        out_specs=pl.BlockSpec((tm, lane), lambda i: (i, 0)),
        compiler_params=pltpu.CompilerParams(dimension_semantics=dims),
        cost_estimate=cost,
        input_output_aliases=({1: 0} if donate_input else {}),
    )(wb, x2d)


def dynamic_model_forward(x, weight, bias, *, min_pallas_elems=_SMALL_ELEMS,
                          tile_bytes=None, donate_input=False):
    """Forward pass of DynamicModel.

    x      : (N, 1, H, W) array (f32 or bf16), or None
    weight : (1, 1, 1, 1) Conv2d(1,1,1) weight
    bias   : (1,)         Conv2d(1,1,1) bias
    donate_input : set True only under jit when the caller can give up x's buffer.
    """
    # Reproduce the `if x is not None` branch of the PyTorch forward.
    if x is None:
        return None

    n, c, h, w = x.shape
    assert c == 1, "DynamicModel uses Conv2d(1, 1, 1): single input channel"

    w_s = jnp.asarray(weight).reshape(()).astype(jnp.float32)
    b_s = jnp.asarray(bias).reshape(()).astype(jnp.float32)

    total = n * c * h * w
    lane = _pick_lane(total)
    if total < min_pallas_elems or lane is None:
        # Small or lane-unfriendly sizes: XLA's fused elementwise is already at
        # HBM roofline and fuses with neighbours; a pallas_call only adds a
        # custom-call boundary here.
        return (x.astype(jnp.float32) * w_s + b_s).astype(x.dtype)

    wb = jnp.stack([w_s, b_s])                       # (2,) f32 SMEM payload
    x2d = x.reshape(total // lane, lane)             # free view of contiguous NCHW
    out2d = _affine_pallas(x2d, wb, tile_bytes=tile_bytes, donate_input=donate_input)
    return out2d.reshape(n, c, h, w)


if __name__ == "__main__":
    key = jax.random.PRNGKey(0)
    kx0, kx1, kx2, kx3, kw, kb = jax.random.split(key, 6)

    # Conv2d(1,1,1) params; PyTorch default init bound is 1/sqrt(fan_in) = 1.0.
    weight = jax.random.uniform(kw, (1, 1, 1, 1), jnp.float32, minval=-1.0, maxval=1.0)
    bias = jax.random.uniform(kb, (1,), jnp.float32, minval=-1.0, maxval=1.0)
    w0 = weight[0, 0, 0, 0]
    b0 = bias[0]

    # 1) Small shape consistent with Conv2d(1,1,1); force the Pallas path so the
    #    kernel itself is exercised (default dispatch would pick plain XLA here).
    x = jax.random.normal(kx0, (2, 1, 16, 16), dtype=jnp.float32)
    y = jax.block_until_ready(dynamic_model_forward(x, weight, bias, min_pallas_elems=0))
    ref = x * w0 + b0
    assert y.shape == x.shape and y.dtype == x.dtype
    assert jnp.allclose(y, ref, atol=1e-6, rtol=1e-6), "mismatch (pallas, single block)"

    # 2) Multi-row tile, still one grid step.
    x1 = jax.random.normal(kx1, (2, 1, 128, 256), dtype=jnp.float32)
    y1 = jax.block_until_ready(dynamic_model_forward(x1, weight, bias, min_pallas_elems=0))
    assert jnp.allclose(y1, x1 * w0 + b0, atol=1e-6, rtol=1e-6), "mismatch (pallas, multi-row)"

    # 3) Ragged final block: 100 rows with a 32-row tile -> 4 grid steps, last one
    #    partially out-of-bounds (validates the masked-write path, no padding used).
    x2 = jax.random.normal(kx2, (2, 1, 100, 256), dtype=jnp.float32)
    y2 = jax.block_until_ready(
        dynamic_model_forward(x2, weight, bias, min_pallas_elems=0, tile_bytes=64 * 1024))
    assert jnp.allclose(y2, x2 * w0 + b0, atol=1e-6, rtol=1e-6), "mismatch (ragged last block)"

    # 4) Native-dtype path: bf16 in, bf16 out (no full-tensor f32 upcast).
    x3 = jax.random.normal(kx3, (2, 1, 64, 64), dtype=jnp.bfloat16)
    y3 = jax.block_until_ready(dynamic_model_forward(x3, weight, bias, min_pallas_elems=0))
    ref3 = (x3.astype(jnp.float32) * w0 + b0).astype(jnp.bfloat16)
    assert y3.dtype == jnp.bfloat16
    assert jnp.allclose(y3.astype(jnp.float32), ref3.astype(jnp.float32),
                        atol=1e-2, rtol=1e-2), "mismatch (bf16 path)"

    # 5) Small / lane-unfriendly shape takes the plain-XLA fallback.
    x4 = jax.random.normal(jax.random.PRNGKey(1), (2, 1, 15, 15), dtype=jnp.float32)
    y4 = jax.block_until_ready(dynamic_model_forward(x4, weight, bias))
    assert jnp.allclose(y4, x4 * w0 + b0, atol=1e-6, rtol=1e-6), "mismatch (XLA fallback)"

    # 6) The `x is None` branch returns None, matching the PyTorch forward.
    assert dynamic_model_forward(None, weight, bias) is None

    print("KERNEL_OK")
</pallas_src>

<mosaic_0001>
module attributes {stable_mosaic.version = 11 : i64} {
  func.func @_affine_kernel(%arg0: i32, %arg1: memref<2xf32, #tpu.memory_space<smem>>, %arg2: memref<1x512xf32, #tpu.memory_space<vmem>>, %arg3: memref<1x512xf32, #tpu.memory_space<vmem>>) attributes {dimension_semantics = [#tpu.dimension_semantics<arbitrary>], iteration_bounds = array<i64: 1>, scalar_prefetch = 0 : i64, scratch_operands = 0 : i64, tpu.core_type = #tpu.core_type<tc>, window_params = [{transform_indices = @transform_0, window_bounds = array<i64: 2>}, {transform_indices = @transform_1, window_bounds = array<i64: 1, 512>}, {transform_indices = @transform_2, window_bounds = array<i64: 1, 512>}]} {
    %c0 = arith.constant 0 : index
    %c0_0 = arith.constant 0 : index
    %0 = vector.load %arg2[%c0, %c0_0] : memref<1x512xf32, #tpu.memory_space<vmem>>, vector<1x512xf32>
    %c0_1 = arith.constant 0 : index
    %1 = memref.load %arg1[%c0_1] : memref<2xf32, #tpu.memory_space<smem>>
    %2 = vector.broadcast %1 : f32 to vector<1x512xf32>
    %3 = arith.mulf %0, %2 : vector<1x512xf32>
    %c1 = arith.constant 1 : index
    %4 = memref.load %arg1[%c1] : memref<2xf32, #tpu.memory_space<smem>>
    %5 = vector.broadcast %4 : f32 to vector<1x512xf32>
    %6 = arith.addf %3, %5 : vector<1x512xf32>
    %c0_2 = arith.constant 0 : index
    %c0_3 = arith.constant 0 : index
    %7 = vector.load %arg3[%c0_2, %c0_3] : memref<1x512xf32, #tpu.memory_space<vmem>>, vector<1x512xf32>
    tpu.vector_store %arg3[%c0_2, %c0_3], %6 {strides = array<i32>} : memref<1x512xf32, #tpu.memory_space<vmem>>, vector<1x512xf32>,
    return
  }
  func.func @transform_0(%arg0: i32) -> i32 {
    %c0_i32 = arith.constant 0 : i32
    %c0_i32_0 = arith.constant 0 : i32
    return %c0_i32 : i32
  }
  func.func @transform_1(%arg0: i32) -> (i32, i32) {
    %c0_i32 = arith.constant 0 : i32
    %c0_i32_0 = arith.constant 0 : i32
    return %arg0, %c0_i32 : i32, i32
  }
  func.func @transform_2(%arg0: i32) -> (i32, i32) {
    %c0_i32 = arith.constant 0 : i32
    %c0_i32_0 = arith.constant 0 : i32
    return %arg0, %c0_i32 : i32, i32
  }
}

</mosaic_0001>

<llo_original>
// kernel: tpu_custom_call.1
$region0: #{tpu_custom_call.1}
  #allocation0 [shape = 'u32[]', space=smem, size = 0x4, offset = 0x4, fixed_abs, tag = 'smem constant byte address 0x4 - core index']
  #allocation1 [shape = 'u32[144,128]{1,0:T(1,128)}', space=vmem, size = 0x12000, scoped, tag = 'internal scratch']
  %s0 = inlined_call_operand.hbm [shape: f32[2], index: 0, kind: input, shape index: {}]
  %s1 = inlined_call_operand.hbm [shape: f32[1,512], index: 1, kind: input, shape index: {}]
  %s2 = inlined_call_operand.hbm [shape: f32[1,512], index: 2, kind: output, shape index: {}]
  %s3 = sld [smem:[#allocation0]]
  $region26: #{tpu_custom_call.1} parent=0
    _
  %s5 = ssub.s32 1, %s3
  %s6 = scalar_select 0, %s5, %s3
  $region1: #{tpu_custom_call.1} parent=0
    #allocation2 [shape = 'u8[512]{0}', space=smem, size = 0x200, scoped, tag = 'input window, operand 0, single buffered']
    #allocation3 [shape = 's32[1]{0}', space=sflag, size = 0x4, scoped, tag = 'scoped memory for tpu_custom_call.1']
    #allocation4 [shape = 's32[1]{0}', space=sflag, size = 0x4, scoped, tag = 'scoped memory for tpu_custom_call.1']
    #allocation5 [shape = 's32[1]{0}', space=sflag, size = 0x4, scoped, tag = 'scoped memory for tpu_custom_call.1']
    #allocation6 [shape = 'u8[2048]{0}', space=vmem, size = 0x800, scoped, tag = 'input window, operand 1, single buffered']
    #allocation7 [shape = 'u8[2048]{0}', space=vmem, size = 0x800, scoped, tag = 'output window, operand 0, single buffered']
    %7 = vsyncpa [#allocation5], 0
    %8 = vsyncpa [#allocation3], 0
    %9 = vsyncpa [#allocation4], 0
    // Predicated region
    $region2: #{tpu_custom_call.1} parent=1 // pred_check
      _
    $region3: #{tpu_custom_call.1} parent=1 // pred_check_branch
      %11 = sbr.rel (0) target = $region5
    $region4: #{tpu_custom_call.1} parent=1 // pred_region
      %s13 = ssub.s32 16, 16
      %14 = vsyncadd [#allocation5], %s13
      %17 = dma.hbm_to_smem %s0, 16, [#allocation2], [#allocation5]
    $region5: #{tpu_custom_call.1} parent=1 // pred_fallthru
      _
    // Predicated region
    $region6: #{tpu_custom_call.1} parent=1 // pred_check
      _
    $region7: #{tpu_custom_call.1} parent=1 // pred_check_branch
      %19 = sbr.rel (0) target = $region9
    $region8: #{tpu_custom_call.1} parent=1 // pred_region
      %s21 = ssub.s32 64, 64
      %22 = vsyncadd [#allocation3], %s21
      %s24 = sshll.u32 [#allocation6], 4
      %s25 = int_to_ptr.vmem [resolvable:$true] %s24
      %27 = dma.hbm_to_vmem [thread:$0]  %s1, 64, %s25, [#allocation3]
    $region9: #{tpu_custom_call.1} parent=1 // pred_fallthru
      _
    // Predicated region
    $region10: #{tpu_custom_call.1} parent=1 // pred_check
      _
    $region11: #{tpu_custom_call.1} parent=1 // pred_check_branch
      %29 = sbr.rel (0) target = $region13
    $region12: #{tpu_custom_call.1} parent=1 // pred_region
      %30 = dma.done [#allocation5], 16
    $region13: #{tpu_custom_call.1} parent=1 // pred_fallthru
      _
    // Predicated region
    $region14: #{tpu_custom_call.1} parent=1 // pred_check
      _
    $region15: #{tpu_custom_call.1} parent=1 // pred_check_branch
      %32 = sbr.rel (0) target = $region17
    $region16: #{tpu_custom_call.1} parent=1 // pred_region
      %33 = dma.done [#allocation3], 64
    $region17: #{tpu_custom_call.1} parent=1 // pred_fallthru
      _
    %34 = sfence
    %v35 = vld [vmem:[#allocation6] sm:$0xf]
    %s36 = sld [smem:[#allocation2]]
    %v37 = vstv %s36
    %v38 = vmul.f32 %v35, %v37
    %s39 = sld [smem:[#allocation2 + $0x1]]
    %v40 = vstv %s39
    %v41 = vadd.f32 %v38, %v40
    %v42 = vlaneseq
    %vm43 = vcmp.ge.s32.totalorder %v42, 0
    %vm44 = vcmp.lt.s32.totalorder %v42, 512
    %vm45 = vmand %vm43, %vm44
    %46 = vst.msk [vmem:[#allocation7] sm:$0xf] %vm45, %v41
    // Predicated region
    $region18: #{tpu_custom_call.1} parent=1 // pred_check
      _
    $region19: #{tpu_custom_call.1} parent=1 // pred_check_branch
      %48 = sbr.rel (0) target = $region21
    $region20: #{tpu_custom_call.1} parent=1 // pred_region
      %s50 = ssub.s32 64, 64
      %51 = vsyncadd [#allocation4], %s50
      %s53 = sshll.u32 [#allocation7], 4
      %s54 = int_to_ptr.vmem [resolvable:$true] %s53
      %56 = dma.vmem_to_hbm [thread:$0]  %s54, 64, %s2, [#allocation4]
    $region21: #{tpu_custom_call.1} parent=1 // pred_fallthru
      _
    // Predicated region
    $region22: #{tpu_custom_call.1} parent=1 // pred_check
      _
    $region23: #{tpu_custom_call.1} parent=1 // pred_check_branch
      %58 = sbr.rel (0) target = $region25
    $region24: #{tpu_custom_call.1} parent=1 // pred_region
      %59 = dma.done [#allocation4], 64
    $region25: #{tpu_custom_call.1} parent=1 // pred_fallthru
      _
    %60 = vsyncpa [#allocation3], 1
    %61 = vsyncpa [#allocation4], 1
    %62 = vsyncpa [#allocation5], 1

</llo_original>
